<compile_context>
chip_gen: v6e
topology: v6e:2x2x1
jax: 0.10.0
libtpu: 0.0.40
codegen_flags: <defaults>
</compile_context>

<pallas_src>
import jax
import jax.numpy as jnp
from jax import lax
from jax.experimental import pallas as pl
from jax.experimental.pallas import tpu as pltpu


_DEFAULT_VMEM_BUDGET = 40 * 1024 * 1024          # per-call plan; fits v7x 64 MiB/TC
_DEFAULT_MAX_RESIDENT_W_BYTES = 12 * 1024 * 1024  # above this -> K-tiled path


def _round_down(v, m):
    return max(m, (v // m) * m)


def _round_up(v, m):
    return ((v + m - 1) // m) * m


def prepare_linear_params(weight, bias, *, compute_dtype=jnp.float32):
    """One-time transform of torch-layout params for the kernel.

    weight: (n_actions, n_features) -> (n_features, n_actions) in compute_dtype
    bias:   (n_actions,)            -> (1, n_actions) float32 (added after the
                                       f32 accumulate, so it stays exact)
    Call this at model-init time; the cost is amortized to zero over forwards.
    """
    w_t = jnp.asarray(weight).T.astype(compute_dtype)
    b_row = jnp.asarray(bias).astype(jnp.float32).reshape(1, -1)
    return w_t, b_row


def _linear_kernel(x_ref, w_ref, b_ref, o_ref):
    # x: (tm, F), w: (F, A), b: (1, A).  Cast x to the weight dtype (no-op for
    # f32 weights, bf16 for pre-cast weights) and accumulate in f32 on the MXU.
    x = x_ref[...].astype(w_ref.dtype)
    acc = jnp.dot(x, w_ref[...], preferred_element_type=jnp.float32)
    o_ref[...] = (acc + b_ref[...]).astype(o_ref.dtype)


def _make_ktiled_kernel(n_features, tk):
    ragged = (n_features % tk) != 0

    def kernel(x_ref, w_ref, b_ref, o_ref, acc_ref):
        k = pl.program_id(1)

        @pl.when(k == 0)
        def _():
            acc_ref[...] = jnp.zeros_like(acc_ref)

        x = x_ref[...]
        w = w_ref[...]
        if ragged:
            # Zero the out-of-bounds K tail (OOB input reads are garbage); mask
            # both operands so stray NaN/Inf garbage cannot leak into the dot.
            valid = n_features - k * tk
            xm = lax.broadcasted_iota(jnp.int32, x.shape, 1) < valid
            wm = lax.broadcasted_iota(jnp.int32, w.shape, 0) < valid
            x = jnp.where(xm, x, jnp.zeros_like(x))
            w = jnp.where(wm, w, jnp.zeros_like(w))

        acc_ref[...] += jnp.dot(x.astype(w.dtype), w,
                                preferred_element_type=jnp.float32)

        @pl.when(k == pl.num_programs(1) - 1)
        def _():
            o_ref[...] = (acc_ref[...] + b_ref[...]).astype(o_ref.dtype)

    return kernel


def linear_forward(x, w_t, b_row, *, tm=None,
                   vmem_budget_bytes=_DEFAULT_VMEM_BUDGET,
                   max_resident_w_bytes=_DEFAULT_MAX_RESIDENT_W_BYTES):
    """y = x @ W.T + b, with (w_t, b_row) from prepare_linear_params.

    x:     (B, n_features)
    w_t:   (n_features, n_actions)  (pre-transposed, f32 or bf16)
    b_row: (1, n_actions) float32
    returns (B, n_actions) in x.dtype
    """
    B, F = x.shape
    Fw, A = w_t.shape
    assert F == Fw, (F, Fw)
    b_row = b_row.reshape(1, A)

    xb = x.dtype.itemsize
    wb = w_t.dtype.itemsize
    out_dtype = x.dtype
    ob = jnp.dtype(out_dtype).itemsize
    w_bytes = F * A * wb

    # Explicit scoped-VMEM limit: v5e's default is only 16 MiB.
    vmem_limit = int(vmem_budget_bytes + (8 << 20))
    cost = pl.CostEstimate(
        flops=2 * B * F * A, transcendentals=0,
        bytes_accessed=B * F * xb + w_bytes + B * A * ob + A * 4)

    # v7x (64 MiB/TC): if W cannot stay VMEM-resident, K-tile the reduction.
    k_tiled = (w_bytes > max_resident_w_bytes) and (F >= 256)

    if not k_tiled:
        if tm is None:
            # Budget: resident W (x2 in case single-buffering is unavailable)
            # plus double-buffered x and out row tiles.
            avail = vmem_budget_bytes - 2 * w_bytes - (1 << 20)
            per_row = 2 * (F * xb + A * ob)
            t = max(avail // max(per_row, 1), 8)
            t = min(int(t), 4096)
            tm = _round_down(t, 128) if t >= 128 else _round_down(t, 8)
            if B >= 1024:
                # v7x megacore: keep >= 2 grid steps so both TensorCores work.
                tm = min(tm, _round_up(pl.cdiv(B, 2), 128))
        tm = int(tm)

        if B <= tm:
            # Whole problem fits the per-step budget (tm itself is the VMEM
            # guard): single-shot, no grid / pipeline bookkeeping.
            return pl.pallas_call(
                _linear_kernel,
                out_shape=jax.ShapeDtypeStruct((B, A), out_dtype),
                compiler_params=pltpu.CompilerParams(
                    vmem_limit_bytes=vmem_limit),
                cost_estimate=cost,
            )(x, w_t, b_row)

        grid_m = pl.cdiv(B, tm)  # ragged last block: OOB writes are masked.

        def call(single_buffer_w):
            if single_buffer_w:
                # W/bias are grid-invariant: single-buffer them so only one
                # copy of W lives in VMEM (default pipelining would hold two).
                w_spec = pl.BlockSpec((F, A), lambda i: (0, 0),
                                      pipeline_mode=pl.Buffered(1))
                b_spec = pl.BlockSpec((1, A), lambda i: (0, 0),
                                      pipeline_mode=pl.Buffered(1))
            else:
                w_spec = pl.BlockSpec((F, A), lambda i: (0, 0))
                b_spec = pl.BlockSpec((1, A), lambda i: (0, 0))
            return pl.pallas_call(
                _linear_kernel,
                out_shape=jax.ShapeDtypeStruct((B, A), out_dtype),
                grid=(grid_m,),
                in_specs=[pl.BlockSpec((tm, F), lambda i: (i, 0)),
                          w_spec, b_spec],
                out_specs=pl.BlockSpec((tm, A), lambda i: (i, 0)),
                compiler_params=pltpu.CompilerParams(
                    dimension_semantics=("parallel",),
                    vmem_limit_bytes=vmem_limit),
                cost_estimate=cost,
            )(x, w_t, b_row)

        try:
            return call(single_buffer_w=True)
        except Exception:
            # TODO(synk): pipeline_mode=pl.Buffered(1) unsupported on this
            # JAX/Mosaic build; fall back to default double-buffering.
            return call(single_buffer_w=False)

    # ---- K-tiled path: W too large to keep resident (v7x 64 MiB/TC). ----
    tk_cap = max((vmem_budget_bytes // 4) // max(2 * A * wb, 1), 128)
    tk = min(_round_down(F, 128), _round_down(tk_cap, 128))
    if tm is None:
        avail = vmem_budget_bytes - 2 * tk * A * wb - (1 << 20)
        per_row = 2 * tk * xb + 2 * A * ob + A * 4
        t = max(avail // max(per_row, 1), 8)
        t = min(int(t), 4096)
        tm = _round_down(t, 128) if t >= 128 else _round_down(t, 8)
    tm = int(tm)

    grid = (pl.cdiv(B, tm), pl.cdiv(F, tk))   # reduction axis last
    kernel = _make_ktiled_kernel(F, tk)
    return pl.pallas_call(
        kernel,
        out_shape=jax.ShapeDtypeStruct((B, A), out_dtype),
        grid=grid,
        in_specs=[
            pl.BlockSpec((tm, tk), lambda i, k: (i, k)),
            pl.BlockSpec((tk, A), lambda i, k: (k, 0)),
            pl.BlockSpec((1, A), lambda i, k: (0, 0)),
        ],
        out_specs=pl.BlockSpec((tm, A), lambda i, k: (i, 0)),
        scratch_shapes=[pltpu.VMEM((tm, A), jnp.float32)],
        compiler_params=pltpu.CompilerParams(
            dimension_semantics=("parallel", "arbitrary"),
            vmem_limit_bytes=vmem_limit),
        cost_estimate=cost,
    )(x, w_t, b_row)


if __name__ == "__main__":
    key = jax.random.PRNGKey(0)
    kw1, kb1, kx1, kx2, kw2, kb2, kx3 = jax.random.split(key, 7)

    # Shapes implied by LinearModel: x is (batch, n_features).
    n_features, n_actions = 32, 16
    bound = 1.0 / jnp.sqrt(jnp.float32(n_features))
    weight = jax.random.uniform(kw1, (n_actions, n_features), jnp.float32,
                                minval=-bound, maxval=bound)   # torch layout (A, F)
    bias = jax.random.uniform(kb1, (n_actions,), jnp.float32,
                              minval=-bound, maxval=bound)

    # One-time param prep (transpose; f32 here, bf16 variant below).
    w_t, b_row = prepare_linear_params(weight, bias)

    # 1) Small batch -> grid-free single-shot path.
    x_small = jax.random.normal(kx1, (8, n_features), jnp.float32)
    y_small = linear_forward(x_small, w_t, b_row)
    jax.block_until_ready(y_small)
    assert y_small.shape == (8, n_actions)
    assert jnp.allclose(y_small, x_small @ weight.T + bias, atol=1e-5, rtol=1e-5)

    # 2) Larger non-tile-multiple batch -> row-tiled grid with a ragged last
    #    block (no x padding, no output slice pass).  tm is overridden small
    #    only to exercise the grid at toy shapes.
    x_big = jax.random.normal(kx2, (300, n_features), jnp.float32)
    y_big = linear_forward(x_big, w_t, b_row, tm=128)
    jax.block_until_ready(y_big)
    assert y_big.shape == (300, n_actions)
    assert jnp.allclose(y_big, x_big @ weight.T + bias, atol=1e-5, rtol=1e-5)

    # 3) bf16 pre-cast weights, f32 accumulate in-kernel.
    w_t16, b_row16 = prepare_linear_params(weight, bias, compute_dtype=jnp.bfloat16)
    y_bf = linear_forward(x_big, w_t16, b_row16, tm=128)
    jax.block_until_ready(y_bf)
    ref_bf = x_big @ w_t16.astype(jnp.float32) + bias
    assert jnp.allclose(y_bf, ref_bf, atol=5e-2, rtol=5e-2)

    # 4) K-tiled path (forced via a tiny resident-W threshold): reduction axis
    #    last, f32 accumulator scratch, ragged K tail masked in-kernel.
    F2 = 320
    bound2 = 1.0 / jnp.sqrt(jnp.float32(F2))
    weight2 = jax.random.uniform(kw2, (n_actions, F2), jnp.float32,
                                 minval=-bound2, maxval=bound2)
    bias2 = jax.random.uniform(kb2, (n_actions,), jnp.float32,
                               minval=-bound2, maxval=bound2)
    w2_t, b2_row = prepare_linear_params(weight2, bias2)
    x_k = jax.random.normal(kx3, (200, F2), jnp.float32)
    y_k = linear_forward(x_k, w2_t, b2_row, tm=128, max_resident_w_bytes=1024)
    jax.block_until_ready(y_k)
    assert y_k.shape == (200, n_actions)
    assert jnp.allclose(y_k, x_k @ weight2.T + bias2, atol=1e-3, rtol=1e-3)

    print("KERNEL_OK")
</pallas_src>

<mosaic_0001>
module attributes {stable_mosaic.version = 11 : i64} {
  func.func @_linear_kernel(%arg0: memref<8x32xf32, #tpu.memory_space<vmem>>, %arg1: memref<32x16xf32, #tpu.memory_space<vmem>>, %arg2: memref<1x16xf32, #tpu.memory_space<vmem>>, %arg3: memref<8x16xf32, #tpu.memory_space<vmem>>) attributes {dimension_semantics = [], scalar_prefetch = 0 : i64, scratch_operands = 0 : i64, tpu.core_type = #tpu.core_type<tc>} {
    %c0 = arith.constant 0 : index
    %c0_0 = arith.constant 0 : index
    %0 = vector.load %arg0[%c0, %c0_0] : memref<8x32xf32, #tpu.memory_space<vmem>>, vector<8x32xf32>
    %c0_1 = arith.constant 0 : index
    %c0_2 = arith.constant 0 : index
    %1 = vector.load %arg1[%c0_1, %c0_2] : memref<32x16xf32, #tpu.memory_space<vmem>>, vector<32x16xf32>
    %cst = arith.constant dense<0.000000e+00> : vector<8x16xf32>
    %2 = tpu.matmul %0, %1, %cst {dimension_numbers = #tpu.dot_dimension_numbers<[1], [0], [0], [1], [0, 0, 1, 1], [], []>} : vector<8x32xf32>, vector<32x16xf32>, vector<8x16xf32> -> vector<8x16xf32>
    %c0_3 = arith.constant 0 : index
    %c0_4 = arith.constant 0 : index
    %3 = vector.load %arg2[%c0_3, %c0_4] : memref<1x16xf32, #tpu.memory_space<vmem>>, vector<1x16xf32>
    %4 = vector.broadcast %3 : vector<1x16xf32> to vector<8x16xf32>
    %5 = arith.addf %2, %4 : vector<8x16xf32>
    %c0_5 = arith.constant 0 : index
    %c0_6 = arith.constant 0 : index
    %6 = vector.load %arg3[%c0_5, %c0_6] : memref<8x16xf32, #tpu.memory_space<vmem>>, vector<8x16xf32>
    tpu.vector_store %arg3[%c0_5, %c0_6], %5 {strides = array<i32>} : memref<8x16xf32, #tpu.memory_space<vmem>>, vector<8x16xf32>,
    return
  }
}

</mosaic_0001>

<llo_original>
// kernel: tpu_custom_call.1
$region0: #{tpu_custom_call.1}
  #allocation0 [shape = 'u32[]', space=smem, size = 0x4, offset = 0x4, fixed_abs, tag = 'smem constant byte address 0x4 - core index']
  #allocation1 [shape = 'u32[144,128]{1,0:T(1,128)}', space=vmem, size = 0x12000, scoped, tag = 'internal scratch']
  %s0 = inlined_call_operand.vmem [shape: f32[8,32], index: 0, kind: input, shape index: {}]
  %s1 = inlined_call_operand.vmem [shape: f32[32,16], index: 1, kind: input, shape index: {}]
  %s2 = inlined_call_operand.vmem [shape: f32[1,16], index: 2, kind: input, shape index: {}]
  %s3 = inlined_call_operand.hbm [shape: f32[8,16], index: 3, kind: output, shape index: {}]
  %s4 = sld [smem:[#allocation0]]
  $region22: #{tpu_custom_call.1} parent=0
    _
  %s6 = ssub.s32 1, %s4
  %s7 = scalar_select 0, %s6, %s4
  $region1: #{tpu_custom_call.1} parent=0
    #allocation2 [shape = 'u8[4096]{0}', space=vmem, size = 0x1000, scoped, tag = 'output window, operand 0, single buffered']
    #allocation3 [shape = 's32[1]{0}', space=sflag, size = 0x4, scoped, tag = 'scoped memory for tpu_custom_call.1']
    %8 = vsyncpa [#allocation3], 0
    // Predicated region
    $region2: #{tpu_custom_call.1} parent=1 // pred_check
      _
    $region3: #{tpu_custom_call.1} parent=1 // pred_check_branch
      %10 = sbr.rel (0) target = $region5
    $region4: #{tpu_custom_call.1} parent=1 // pred_region
      _
    $region5: #{tpu_custom_call.1} parent=1 // pred_fallthru
      _
    // Predicated region
    $region6: #{tpu_custom_call.1} parent=1 // pred_check
      _
    $region7: #{tpu_custom_call.1} parent=1 // pred_check_branch
      %12 = sbr.rel (0) target = $region9
    $region8: #{tpu_custom_call.1} parent=1 // pred_region
      _
    $region9: #{tpu_custom_call.1} parent=1 // pred_fallthru
      _
    // Predicated region
    $region10: #{tpu_custom_call.1} parent=1 // pred_check
      _
    $region11: #{tpu_custom_call.1} parent=1 // pred_check_branch
      %14 = sbr.rel (0) target = $region13
    $region12: #{tpu_custom_call.1} parent=1 // pred_region
      _
    $region13: #{tpu_custom_call.1} parent=1 // pred_fallthru
      _
    %v15 = vld [vmem:[%s0] sm:$0xff]
    %v16 = vld [vmem:[%s1] sm:$0xff]
    %v17 = vld [vmem:[%s1 + $0x8] sm:$0xff]
    %v18 = vld [vmem:[%s1 + $0x10] sm:$0xff]
    %v19 = vld [vmem:[%s1 + $0x18] sm:$0xff]
    %v20 = vld [vmem:[%s2] sm:$0x1]
    %v22 = vlaneseq
    %v23 = vshrl.u32 %v22, 7
    %v24 = vsub.s32 0, %v23
    %v25 = vrot.slane %v20, %v24
    %vm27 = vcmask 261120
    %v29 = vsel %vm27, %v15, 0
    %31 = vmatprep.subr.mxu0 0.0
    %32 = vmatpush1.msra.mxu0 0.0
    %33 = vmatprep.subr.mxu0 0.0
    %34 = vmatpush1.msra.mxu0 0.0
    %35 = vmatprep.subr.mxu0 0.0
    %36 = vmatpush1.msra.mxu0 0.0
    %37 = vmatprep.subr.mxu0 0.0
    %38 = vmatpush1.msra.mxu0 0.0
    %39 = vmatprep.subr.mxu0 0.0
    %40 = vmatpush1.msra.mxu0 0.0
    %41 = vmatprep.subr.mxu0 0.0
    %42 = vmatpush1.msra.mxu0 0.0
    %43 = vmatprep.subr.mxu0 0.0
    %44 = vmatpush1.msra.mxu0 0.0
    %45 = vmatprep.subr.mxu0 0.0
    %46 = vmatpush1.msra.mxu0 0.0
    %47 = vmatprep.subr.mxu0 0.0
    %48 = vmatpush1.msra.mxu0 0.0
    %49 = vmatprep.subr.mxu0 0.0
    %50 = vmatpush1.msra.mxu0 0.0
    %51 = vmatprep.subr.mxu0 0.0
    %52 = vmatpush1.msra.mxu0 0.0
    %53 = vmatprep.subr.mxu0 0.0
    %54 = vmatpush1.msra.mxu0 0.0
    %55 = vmatprep.subr.mxu0 0.0
    %56 = vmatpush1.msra.mxu0 %v19
    %57 = vmatprep.subr.mxu0 0.0
    %58 = vmatpush1.msra.mxu0 %v18
    %59 = vmatprep.subr.mxu0 0.0
    %60 = vmatpush1.msra.mxu0 %v17
    %61 = vmatprep.subr.mxu0 0.0
    %62 = vmatpush1.msra.mxu0 %v16
    %63 = vmatprep.subr.mxu0 0.0
    %64 = vmatpush2.msra.mxu0 0.0
    %65 = vmatprep.subr.mxu0 0.0
    %66 = vmatpush2.msra.mxu0 0.0
    %67 = vmatprep.subr.mxu0 0.0
    %68 = vmatpush2.msra.mxu0 0.0
    %69 = vmatprep.subr.mxu0 0.0
    %70 = vmatpush2.msra.mxu0 0.0
    %71 = vmatprep.subr.mxu0 0.0
    %72 = vmatpush2.msra.mxu0 0.0
    %73 = vmatprep.subr.mxu0 0.0
    %74 = vmatpush2.msra.mxu0 0.0
    %75 = vmatprep.subr.mxu0 0.0
    %76 = vmatpush2.msra.mxu0 0.0
    %77 = vmatprep.subr.mxu0 0.0
    %78 = vmatpush2.msra.mxu0 0.0
    %79 = vmatprep.subr.mxu0 0.0
    %80 = vmatpush2.msra.mxu0 0.0
    %81 = vmatprep.subr.mxu0 0.0
    %82 = vmatpush2.msra.mxu0 0.0
    %83 = vmatprep.subr.mxu0 0.0
    %84 = vmatpush2.msra.mxu0 0.0
    %85 = vmatprep.subr.mxu0 0.0
    %86 = vmatpush2.msra.mxu0 0.0
    %87 = vmatprep.subr.mxu0 0.0
    %88 = vmatpush2.msra.mxu0 0.0
    %89 = vmatprep.subr.mxu0 0.0
    %90 = vmatpush2.msra.mxu0 0.0
    %91 = vmatprep.subr.mxu0 0.0
    %92 = vmatpush2.msra.mxu0 0.0
    %93 = vmatprep.subr.mxu0 0.0
    %94 = vmatpush2.msra.mxu0 0.0
    %95 = vmatprep.mubr.f32.mxu0 0.0
    %96 = vmatmul.mubr.f32.gmra.mxu0 %v29
    %v97 = vpop.f32.mrf.mxu0
    %v98 = vadd.f32 %v25, %v97
    %v99 = vpop.f32.mrf.mxu0
    %100 = vdwg.mxu0
    %vm101 = vcmask 130048
    %102 = vst.msk [vmem:[#allocation2] sm:$0xff] %vm101, %v98
    // Predicated region
    $region14: #{tpu_custom_call.1} parent=1 // pred_check
      _
    $region15: #{tpu_custom_call.1} parent=1 // pred_check_branch
      %104 = sbr.rel (0) target = $region17
    $region16: #{tpu_custom_call.1} parent=1 // pred_region
      %s106 = ssub.s32 128, 128
      %107 = vsyncadd [#allocation3], %s106
      %s109 = sshll.u32 [#allocation2], 4
      %s110 = int_to_ptr.vmem [resolvable:$true] %s109
      %112 = dma.vmem_to_hbm [thread:$0]  %s110, 128, %s3, [#allocation3]
    $region17: #{tpu_custom_call.1} parent=1 // pred_fallthru
      _
    // Predicated region
    $region18: #{tpu_custom_call.1} parent=1 // pred_check
      _
    $region19: #{tpu_custom_call.1} parent=1 // pred_check_branch
      %114 = sbr.rel (0) target = $region21
    $region20: #{tpu_custom_call.1} parent=1 // pred_region
      %115 = dma.done [#allocation3], 128
    $region21: #{tpu_custom_call.1} parent=1 // pred_fallthru
      _
    %116 = vsyncpa [#allocation3], 1

</llo_original>
